<compile_context>
chip_gen: v5e
topology: v5e:2x2
jax: 0.10.0
libtpu: 0.0.40
codegen_flags: <defaults>
</compile_context>

<pallas_src>
import functools

import jax
import jax.numpy as jnp
from jax.experimental import pallas as pl
from jax.experimental.pallas import tpu as pltpu


def _round_up(x: int, m: int) -> int:
    return ((x + m - 1) // m) * m


# -----------------------------------------------------------------------------
# Kernel 1: BYOL loss head
#   loss = (2 - 2*<normalize(z2_pred), z2_target>) + (2 - 2*<normalize(z1_pred), z1_target>)
# -----------------------------------------------------------------------------
def _byol_loss_kernel(p2_ref, t2_ref, p1_ref, t1_ref, out_ref):
    # Inputs may be bf16; all math runs in f32.  No MXU work here — the kernel is
    # HBM-bandwidth bound (elementwise multiplies + lane reductions on VPU/XLU).
    # NOTE(vreg pressure): four (TM, D) f32 tiles are live at once; if a bundle dump
    # ever shows spill vld/vst dominating, chunk the reductions over sublane slabs or
    # cap TM at 256 for D >= 1024.  Not done pre-emptively since the kernel is HBM-bound.
    p2 = p2_ref[...].astype(jnp.float32)   # (TM, D)
    t2 = t2_ref[...].astype(jnp.float32)
    p1 = p1_ref[...].astype(jnp.float32)
    t1 = t1_ref[...].astype(jnp.float32)

    # F.normalize(pred, dim=1) followed by a row-wise dot with the (un-normalized)
    # target.  Instead of normalizing the whole (TM, D) tile elementwise we scale the
    # per-row scalar dot by 1/max(||pred||, eps): identical math, saves TM*D VPU
    # multiplies per tile.  Each row is visited exactly once by the grid.
    eps_sq = 1e-24  # (F.normalize eps = 1e-12) squared
    ss2 = jnp.sum(p2 * p2, axis=-1, keepdims=True)           # (TM, 1)
    ss1 = jnp.sum(p1 * p1, axis=-1, keepdims=True)
    inv2 = jax.lax.rsqrt(jnp.maximum(ss2, eps_sq))            # EUP rsqrt
    inv1 = jax.lax.rsqrt(jnp.maximum(ss1, eps_sq))
    dot2 = jnp.sum(p2 * t2, axis=-1, keepdims=True)           # (TM, 1)
    dot1 = jnp.sum(p1 * t1, axis=-1, keepdims=True)

    # loss_1 + loss_2 = (2 - 2*cos_2') + (2 - 2*cos_1')
    loss = 4.0 - 2.0 * (dot2 * inv2 + dot1 * inv1)            # (TM, 1)
    # Lane-dense store: relayout (TM, 1) -> (1, TM) so the output block writes wide,
    # unmasked vst instead of 1-lane masked partial stores.
    out_ref[...] = loss.reshape(1, loss.shape[0])


def byol_loss(z2_pred, z2_target, z1_pred, z1_target):
    """Per-sample BYOL loss (loss_1 + loss_2), shape [N], float32.

    z2_pred  : predictor(online_network(view_1))   [N, D]  (pre-normalization)
    z2_target: target_network(view_2)              [N, D]
    z1_pred  : predictor(online_network(view_2))   [N, D]  (pre-normalization)
    z1_target: target_network(view_1)              [N, D]
    """
    assert z2_pred.ndim == 2
    assert z2_pred.shape == z2_target.shape == z1_pred.shape == z1_target.shape
    n, d = z2_pred.shape
    itemsize = jnp.dtype(z2_pred.dtype).itemsize

    if n <= 128:
        # Single block equal to the full array (always a legal block shape) — no
        # padding, no partial-block machinery needed for tiny batches.
        tm = n
    else:
        # Row tile: largest multiple of 128 (capped at 1024) keeping the 4
        # double-buffered input tiles around ~24 MiB, inside the 32 MiB scoped-VMEM
        # limit set below (legal on v5e/v6e and under v7x's 64 MiB physical VMEM).
        budget = 24 * 1024 * 1024
        tm = budget // (4 * 2 * d * itemsize)
        tm = int(max(128, min(1024, (tm // 128) * 128)))
        tm = min(tm, (n // 128) * 128)   # keep blocks <= array; last block may be ragged
    grid = (pl.cdiv(n, tm),)

    # Full feature dim per block (block dim == array dim, no 128-divisibility needed);
    # Pallas masks the ragged last row-block, so no wrapper-side jnp.pad copies.
    in_spec = pl.BlockSpec((tm, d), lambda i: (i, 0))
    out = pl.pallas_call(
        _byol_loss_kernel,
        out_shape=jax.ShapeDtypeStruct((1, n), jnp.float32),
        grid=grid,
        in_specs=[in_spec, in_spec, in_spec, in_spec],
        out_specs=pl.BlockSpec((1, tm), lambda i: (0, i)),
        compiler_params=pltpu.CompilerParams(
            # Rows are independent -> shard grid steps across TensorCores (v7x).
            dimension_semantics=("parallel",),
            vmem_limit_bytes=32 * 1024 * 1024,
        ),
    )(z2_pred, z2_target, z1_pred, z1_target)
    return out[0]


# -----------------------------------------------------------------------------
# Kernel 2: EMA target-network update (BYOL._update_target_network)
#   new_target = tau * target + (1 - tau) * online    (elementwise over flat params)
# -----------------------------------------------------------------------------
def _ema_kernel(tgt_ref, onl_ref, out_ref, *, tau):
    t = tgt_ref[...].astype(jnp.float32)
    o = onl_ref[...].astype(jnp.float32)
    # TODO(synk): for bf16 parameters consider pltpu.stochastic_round (or keep an f32
    #             master copy) — with tau=0.99 the (1-tau)*delta term is often below
    #             bf16 round-to-nearest resolution and the target can freeze.
    out_ref[...] = (tau * t + (1.0 - tau) * o).astype(out_ref.dtype)


def ema_update(target_params, online_params, tau):
    """Functional equivalent of _update_target_network for a flat parameter vector.

    Streams the 1-D parameter vector directly (no pad / reshape / slice copies) and
    aliases the output onto the target-params input, so under jit with a donated
    target buffer the update is fully in-place like the PyTorch no_grad version.
    """
    assert target_params.ndim == 1 and target_params.shape == online_params.shape
    assert target_params.dtype == online_params.dtype
    p = target_params.shape[0]

    # 512K-element blocks (2 MiB f32 / 1 MiB bf16): 2 inputs double-buffered plus the
    # aliased output stay ~12 MiB — below even v5e's 16 MiB scoped-VMEM default, but we
    # set the limit explicitly anyway for headroom.
    if p <= 512 * 1024:
        chunk = p                      # single block == full array (always legal)
    else:
        chunk = 512 * 1024             # multiple of 128; last block may be ragged
    grid = (pl.cdiv(p, chunk),)

    out = pl.pallas_call(
        functools.partial(_ema_kernel, tau=float(tau)),
        out_shape=jax.ShapeDtypeStruct((p,), target_params.dtype),
        grid=grid,
        in_specs=[
            pl.BlockSpec((chunk,), lambda i: (i,)),
            pl.BlockSpec((chunk,), lambda i: (i,)),
        ],
        out_specs=pl.BlockSpec((chunk,), lambda i: (i,)),
        input_output_aliases={0: 0},   # write the new target over the old target buffer
        compiler_params=pltpu.CompilerParams(
            dimension_semantics=("parallel",),
            vmem_limit_bytes=32 * 1024 * 1024,
        ),
    )(target_params, online_params)
    return out


# -----------------------------------------------------------------------------
# Pure-JAX references
# -----------------------------------------------------------------------------
def _byol_loss_reference(z2_pred, z2_target, z1_pred, z1_target):
    def _norm(x):
        nrm = jnp.sqrt(jnp.sum(x * x, axis=-1, keepdims=True))
        return x / jnp.maximum(nrm, 1e-12)

    p2 = _norm(z2_pred.astype(jnp.float32))
    p1 = _norm(z1_pred.astype(jnp.float32))
    loss_1 = 2.0 - 2.0 * jnp.sum(p2 * z2_target.astype(jnp.float32), axis=-1)
    loss_2 = 2.0 - 2.0 * jnp.sum(p1 * z1_target.astype(jnp.float32), axis=-1)
    return loss_1 + loss_2


if __name__ == "__main__":
    key = jax.random.PRNGKey(0)
    k = jax.random.split(key, 6)

    # Small shapes consistent with the module: batch N=8, ssl_feature_dim D=128.
    # The four embeddings stand in for the (untranslated) encoder / predictor outputs.
    N, D = 8, 128
    z2_pred = jax.random.normal(k[0], (N, D), jnp.float32)
    z2_target = jax.random.normal(k[1], (N, D), jnp.float32)
    z1_pred = jax.random.normal(k[2], (N, D), jnp.float32)
    z1_target = jax.random.normal(k[3], (N, D), jnp.float32)

    loss_ref = _byol_loss_reference(z2_pred, z2_target, z1_pred, z1_target)
    loss = jax.block_until_ready(byol_loss(z2_pred, z2_target, z1_pred, z1_target))
    assert loss.shape == (N,)
    assert jnp.allclose(loss, loss_ref, atol=1e-4, rtol=1e-4)

    # EMA target-network update (forward() ends with self._update_target_network()).
    tau = 0.99
    P = 4096  # small flat parameter vector for the demo
    target_flat = jax.random.normal(k[4], (P,), jnp.float32)
    online_flat = jax.random.normal(k[5], (P,), jnp.float32)
    # Compute the reference BEFORE the aliased kernel call.
    ema_ref = tau * target_flat + (1.0 - tau) * online_flat
    new_target = jax.block_until_ready(ema_update(target_flat, online_flat, tau))
    assert new_target.shape == (P,)
    assert jnp.allclose(new_target, ema_ref, atol=1e-6, rtol=1e-6)

    print("KERNEL_OK")
</pallas_src>

<mosaic_0001>
module attributes {stable_mosaic.version = 11 : i64} {
  func.func @_byol_loss_kernel(%arg0: i32, %arg1: memref<8x128xf32, #tpu.memory_space<vmem>>, %arg2: memref<8x128xf32, #tpu.memory_space<vmem>>, %arg3: memref<8x128xf32, #tpu.memory_space<vmem>>, %arg4: memref<8x128xf32, #tpu.memory_space<vmem>>, %arg5: memref<1x8xf32, #tpu.memory_space<vmem>>) attributes {dimension_semantics = [#tpu.dimension_semantics<parallel>], iteration_bounds = array<i64: 1>, scalar_prefetch = 0 : i64, scratch_operands = 0 : i64, tpu.core_type = #tpu.core_type<tc>, window_params = [{transform_indices = @transform_0, window_bounds = array<i64: 8, 128>}, {transform_indices = @transform_1, window_bounds = array<i64: 8, 128>}, {transform_indices = @transform_2, window_bounds = array<i64: 8, 128>}, {transform_indices = @transform_3, window_bounds = array<i64: 8, 128>}, {transform_indices = @transform_4, window_bounds = array<i64: 1, 8>}]} {
    %c0 = arith.constant 0 : index
    %c0_0 = arith.constant 0 : index
    %0 = vector.load %arg1[%c0, %c0_0] : memref<8x128xf32, #tpu.memory_space<vmem>>, vector<8x128xf32>
    %c0_1 = arith.constant 0 : index
    %c0_2 = arith.constant 0 : index
    %1 = vector.load %arg2[%c0_1, %c0_2] : memref<8x128xf32, #tpu.memory_space<vmem>>, vector<8x128xf32>
    %c0_3 = arith.constant 0 : index
    %c0_4 = arith.constant 0 : index
    %2 = vector.load %arg3[%c0_3, %c0_4] : memref<8x128xf32, #tpu.memory_space<vmem>>, vector<8x128xf32>
    %c0_5 = arith.constant 0 : index
    %c0_6 = arith.constant 0 : index
    %3 = vector.load %arg4[%c0_5, %c0_6] : memref<8x128xf32, #tpu.memory_space<vmem>>, vector<8x128xf32>
    %4 = arith.mulf %0, %0 : vector<8x128xf32>
    %cst = arith.constant dense<0.000000e+00> : vector<8xf32>
    %5 = vector.multi_reduction <add>, %4, %cst [1] : vector<8x128xf32> to vector<8xf32>
    %6 = vector.shape_cast %5 : vector<8xf32> to vector<8x1xf32>
    %7 = arith.mulf %2, %2 : vector<8x128xf32>
    %cst_7 = arith.constant dense<0.000000e+00> : vector<8xf32>
    %8 = vector.multi_reduction <add>, %7, %cst_7 [1] : vector<8x128xf32> to vector<8xf32>
    %9 = vector.shape_cast %8 : vector<8xf32> to vector<8x1xf32>
    %cst_8 = arith.constant 1.000000e-24 : f32
    %10 = vector.broadcast %cst_8 : f32 to vector<8x1xf32>
    %11 = arith.maximumf %6, %10 : vector<8x1xf32>
    %12 = math.rsqrt %11 : vector<8x1xf32>
    %cst_9 = arith.constant 1.000000e-24 : f32
    %13 = vector.broadcast %cst_9 : f32 to vector<8x1xf32>
    %14 = arith.maximumf %9, %13 : vector<8x1xf32>
    %15 = math.rsqrt %14 : vector<8x1xf32>
    %16 = arith.mulf %0, %1 : vector<8x128xf32>
    %cst_10 = arith.constant dense<0.000000e+00> : vector<8xf32>
    %17 = vector.multi_reduction <add>, %16, %cst_10 [1] : vector<8x128xf32> to vector<8xf32>
    %18 = vector.shape_cast %17 : vector<8xf32> to vector<8x1xf32>
    %19 = arith.mulf %2, %3 : vector<8x128xf32>
    %cst_11 = arith.constant dense<0.000000e+00> : vector<8xf32>
    %20 = vector.multi_reduction <add>, %19, %cst_11 [1] : vector<8x128xf32> to vector<8xf32>
    %21 = vector.shape_cast %20 : vector<8xf32> to vector<8x1xf32>
    %22 = arith.mulf %18, %12 : vector<8x1xf32>
    %23 = arith.mulf %21, %15 : vector<8x1xf32>
    %24 = arith.addf %22, %23 : vector<8x1xf32>
    %cst_12 = arith.constant 2.000000e+00 : f32
    %25 = vector.broadcast %cst_12 : f32 to vector<8x1xf32>
    %26 = arith.mulf %25, %24 : vector<8x1xf32>
    %cst_13 = arith.constant 4.000000e+00 : f32
    %27 = vector.broadcast %cst_13 : f32 to vector<8x1xf32>
    %28 = arith.subf %27, %26 : vector<8x1xf32>
    %29 = vector.shape_cast %28 : vector<8x1xf32> to vector<1x8xf32>
    %c0_14 = arith.constant 0 : index
    %c0_15 = arith.constant 0 : index
    %30 = vector.load %arg5[%c0_14, %c0_15] : memref<1x8xf32, #tpu.memory_space<vmem>>, vector<1x8xf32>
    tpu.vector_store %arg5[%c0_14, %c0_15], %29 {strides = array<i32>} : memref<1x8xf32, #tpu.memory_space<vmem>>, vector<1x8xf32>,
    return
  }
  func.func @transform_0(%arg0: i32) -> (i32, i32) {
    %c0_i32 = arith.constant 0 : i32
    %c0_i32_0 = arith.constant 0 : i32
    return %arg0, %c0_i32 : i32, i32
  }
  func.func @transform_1(%arg0: i32) -> (i32, i32) {
    %c0_i32 = arith.constant 0 : i32
    %c0_i32_0 = arith.constant 0 : i32
    return %arg0, %c0_i32 : i32, i32
  }
  func.func @transform_2(%arg0: i32) -> (i32, i32) {
    %c0_i32 = arith.constant 0 : i32
    %c0_i32_0 = arith.constant 0 : i32
    return %arg0, %c0_i32 : i32, i32
  }
  func.func @transform_3(%arg0: i32) -> (i32, i32) {
    %c0_i32 = arith.constant 0 : i32
    %c0_i32_0 = arith.constant 0 : i32
    return %arg0, %c0_i32 : i32, i32
  }
  func.func @transform_4(%arg0: i32) -> (i32, i32) {
    %c0_i32 = arith.constant 0 : i32
    %c0_i32_0 = arith.constant 0 : i32
    return %c0_i32, %arg0 : i32, i32
  }
}

</mosaic_0001>

<llo_original>
// kernel: tpu_custom_call.1
$region0: #{tpu_custom_call.1}
  #allocation0 [shape = 'u32[]', space=smem, size = 0x4, offset = 0x4, fixed_abs, tag = 'smem constant byte address 0x4 - core index']
  #allocation1 [shape = 'u32[72,128]{1,0:T(1,128)}', space=vmem, size = 0x9000, scoped, tag = 'internal scratch']
  %s0 = inlined_call_operand.hbm [shape: f32[8,128], index: 0, kind: input, shape index: {}]
  %s1 = inlined_call_operand.hbm [shape: f32[8,128], index: 1, kind: input, shape index: {}]
  %s2 = inlined_call_operand.hbm [shape: f32[8,128], index: 2, kind: input, shape index: {}]
  %s3 = inlined_call_operand.hbm [shape: f32[8,128], index: 3, kind: input, shape index: {}]
  %s4 = inlined_call_operand.hbm [shape: f32[1,8], index: 4, kind: output, shape index: {}]
  %s5 = sld [smem:[#allocation0]]
  $region42: #{tpu_custom_call.1} parent=0
    _
  %s7 = ssub.s32 1, %s5
  %s8 = scalar_select 0, %s7, %s5
  $region1: #{tpu_custom_call.1} parent=0
    #allocation2 [shape = 'u8[4096]{0}', space=vmem, size = 0x1000, scoped, tag = 'input window, operand 0, single buffered']
    #allocation3 [shape = 's32[1]{0}', space=sflag, size = 0x4, scoped, tag = 'scoped memory for tpu_custom_call.1']
    #allocation4 [shape = 's32[1]{0}', space=sflag, size = 0x4, scoped, tag = 'scoped memory for tpu_custom_call.1']
    #allocation5 [shape = 'u8[4096]{0}', space=vmem, size = 0x1000, scoped, tag = 'input window, operand 1, single buffered']
    #allocation6 [shape = 's32[1]{0}', space=sflag, size = 0x4, scoped, tag = 'scoped memory for tpu_custom_call.1']
    #allocation7 [shape = 'u8[4096]{0}', space=vmem, size = 0x1000, scoped, tag = 'input window, operand 2, single buffered']
    #allocation8 [shape = 'u8[4096]{0}', space=vmem, size = 0x1000, scoped, tag = 'input window, operand 3, single buffered']
    #allocation9 [shape = 's32[1]{0}', space=sflag, size = 0x4, scoped, tag = 'scoped memory for tpu_custom_call.1']
    #allocation10 [shape = 'u8[512]{0}', space=vmem, size = 0x400, scoped, tag = 'output window, operand 0, single buffered']
    %9 = vsyncpa [#allocation3], 0
    %10 = vsyncpa [#allocation6], 0
    %11 = vsyncpa [#allocation9], 0
    %12 = vsyncpa [#allocation4], 0
    // Predicated region
    $region2: #{tpu_custom_call.1} parent=1 // pred_check
      _
    $region3: #{tpu_custom_call.1} parent=1 // pred_check_branch
      %14 = sbr.rel (0) target = $region5
    $region4: #{tpu_custom_call.1} parent=1 // pred_region
      %16 = vsyncadd [#allocation3], 0
      %s18 = sshll.u32 %s0, 4
      %s19 = int_to_ptr.hbm [resolvable:$true] %s18
      %s20 = sshll.u32 [#allocation2], 4
      %s21 = int_to_ptr.vmem [resolvable:$true] %s20
      %23 = dma.hbm_to_vmem [thread:$0]  %s19, 128, %s21, [#allocation3]
    $region5: #{tpu_custom_call.1} parent=1 // pred_fallthru
      _
    // Predicated region
    $region6: #{tpu_custom_call.1} parent=1 // pred_check
      _
    $region7: #{tpu_custom_call.1} parent=1 // pred_check_branch
      %25 = sbr.rel (0) target = $region9
    $region8: #{tpu_custom_call.1} parent=1 // pred_region
      %27 = vsyncadd [#allocation6], 0
      %s29 = sshll.u32 %s1, 4
      %s30 = int_to_ptr.hbm [resolvable:$true] %s29
      %s31 = sshll.u32 [#allocation5], 4
      %s32 = int_to_ptr.vmem [resolvable:$true] %s31
      %34 = dma.hbm_to_vmem [thread:$0]  %s30, 128, %s32, [#allocation6]
    $region9: #{tpu_custom_call.1} parent=1 // pred_fallthru
      _
    // Predicated region
    $region10: #{tpu_custom_call.1} parent=1 // pred_check
      _
    $region11: #{tpu_custom_call.1} parent=1 // pred_check_branch
      %36 = sbr.rel (0) target = $region13
    $region12: #{tpu_custom_call.1} parent=1 // pred_region
      %38 = vsyncadd [#allocation6], 0
      %s40 = sshll.u32 %s2, 4
      %s41 = int_to_ptr.hbm [resolvable:$true] %s40
      %s42 = sshll.u32 [#allocation7], 4
      %s43 = int_to_ptr.vmem [resolvable:$true] %s42
      %45 = dma.hbm_to_vmem [thread:$0]  %s41, 128, %s43, [#allocation6]
    $region13: #{tpu_custom_call.1} parent=1 // pred_fallthru
      _
    // Predicated region
    $region14: #{tpu_custom_call.1} parent=1 // pred_check
      _
    $region15: #{tpu_custom_call.1} parent=1 // pred_check_branch
      %47 = sbr.rel (0) target = $region17
    $region16: #{tpu_custom_call.1} parent=1 // pred_region
      %49 = vsyncadd [#allocation9], 0
      %s51 = sshll.u32 %s3, 4
      %s52 = int_to_ptr.hbm [resolvable:$true] %s51
      %s53 = sshll.u32 [#allocation8], 4
      %s54 = int_to_ptr.vmem [resolvable:$true] %s53
      %56 = dma.hbm_to_vmem [thread:$0]  %s52, 128, %s54, [#allocation9]
    $region17: #{tpu_custom_call.1} parent=1 // pred_fallthru
      _
    // Predicated region
    $region18: #{tpu_custom_call.1} parent=1 // pred_check
      _
    $region19: #{tpu_custom_call.1} parent=1 // pred_check_branch
      %58 = sbr.rel (0) target = $region21
    $region20: #{tpu_custom_call.1} parent=1 // pred_region
      %60 = dma.done [#allocation3], 128
    $region21: #{tpu_custom_call.1} parent=1 // pred_fallthru
      _
    // Predicated region
    $region22: #{tpu_custom_call.1} parent=1 // pred_check
      _
    $region23: #{tpu_custom_call.1} parent=1 // pred_check_branch
      %62 = sbr.rel (0) target = $region25
    $region24: #{tpu_custom_call.1} parent=1 // pred_region
      %64 = dma.done [#allocation6], 128
    $region25: #{tpu_custom_call.1} parent=1 // pred_fallthru
      _
    // Predicated region
    $region26: #{tpu_custom_call.1} parent=1 // pred_check
      _
    $region27: #{tpu_custom_call.1} parent=1 // pred_check_branch
      %66 = sbr.rel (0) target = $region29
    $region28: #{tpu_custom_call.1} parent=1 // pred_region
      %68 = dma.done [#allocation6], 128
    $region29: #{tpu_custom_call.1} parent=1 // pred_fallthru
      _
    // Predicated region
    $region30: #{tpu_custom_call.1} parent=1 // pred_check
      _
    $region31: #{tpu_custom_call.1} parent=1 // pred_check_branch
      %70 = sbr.rel (0) target = $region33
    $region32: #{tpu_custom_call.1} parent=1 // pred_region
      %72 = dma.done [#allocation9], 128
    $region33: #{tpu_custom_call.1} parent=1 // pred_fallthru
      _
    %v73 = vld [vmem:[#allocation2] sm:$0xff]
    %v74 = vld [vmem:[#allocation5] sm:$0xff]
    %v75 = vld [vmem:[#allocation7] sm:$0xff]
    %v76 = vld [vmem:[#allocation8] sm:$0xff]
    %v77 = vmul.f32 %v73, %v73
    %78 = vadd.xlane.f32.xlu0 %v77
    %v79 = vpop.xlane.xlu0 %78
    %v80 = vmul.f32 %v75, %v75
    %81 = vadd.xlane.f32.xlu0 %v80
    %v82 = vpop.xlane.xlu0 %81
    %v83 = vmax.f32 %v79, 1e-24
    %v84 = vrsqrt.pop %v83
    %v85 = vmul.f32 %v84, %v83
    %v86 = vmul.f32 %v85, %v84
    %v87 = vmul.f32 0.5, %v86
    %v88 = vsub.f32 1.5, %v87
    %v89 = vmul.f32 %v84, %v88
    %vm90 = vweird.f32 %v83
    %vm91 = vweird.f32 %v84
    %vm92 = vmor %vm90, %vm91
    %v93 = vsel %vm92, %v84, %v89
    %v94 = vmax.f32 %v82, 1e-24
    %v95 = vrsqrt.pop %v94
    %v96 = vmul.f32 %v95, %v94
    %v97 = vmul.f32 %v96, %v95
    %v98 = vmul.f32 0.5, %v97
    %v99 = vsub.f32 1.5, %v98
    %v100 = vmul.f32 %v95, %v99
    %vm101 = vweird.f32 %v94
    %vm102 = vweird.f32 %v95
    %vm103 = vmor %vm101, %vm102
    %v104 = vsel %vm103, %v95, %v100
    %v105 = vmul.f32 %v73, %v74
    %106 = vadd.xlane.f32.xlu0 %v105
    %v107 = vpop.xlane.xlu0 %106
    %v108 = vmul.f32 %v75, %v76
    %109 = vadd.xlane.f32.xlu0 %v108
    %v110 = vpop.xlane.xlu0 %109
    %v111 = vmul.f32 %v107, %v93
    %v112 = vmul.f32 %v110, %v104
    %v113 = vadd.f32 %v111, %v112
    %v114 = vmul.f32 %v113, 2.0
    %v115 = vsub.f32 4.0, %v114
    %v117 = vlaneseq
    %v118 = vand.u32 %v117, 127
    %v119 = vperm.slane %v115, %v118
    %vm121 = vcmask 57344
    %122 = vst.msk [vmem:[#allocation10] sm:$0x1] %vm121, %v119
    // Predicated region
    $region34: #{tpu_custom_call.1} parent=1 // pred_check
      _
    $region35: #{tpu_custom_call.1} parent=1 // pred_check_branch
      %124 = sbr.rel (0) target = $region37
    $region36: #{tpu_custom_call.1} parent=1 // pred_region
      %126 = vsyncadd [#allocation4], 0
      %s128 = sshll.u32 [#allocation10], 4
      %s129 = int_to_ptr.vmem [resolvable:$true] %s128
      %s130 = sshll.u32 %s4, 4
      %s131 = int_to_ptr.hbm [resolvable:$true] %s130
      %133 = dma.vmem_to_hbm [thread:$0]  %s129, 16, %s131, [#allocation4]
    $region37: #{tpu_custom_call.1} parent=1 // pred_fallthru
      _
    // Predicated region
    $region38: #{tpu_custom_call.1} parent=1 // pred_check
      _
    $region39: #{tpu_custom_call.1} parent=1 // pred_check_branch
      %135 = sbr.rel (0) target = $region41
    $region40: #{tpu_custom_call.1} parent=1 // pred_region
      %137 = dma.done [#allocation4], 16
    $region41: #{tpu_custom_call.1} parent=1 // pred_fallthru
      _
    %138 = vsyncpa [#allocation3], 1
    %139 = vsyncpa [#allocation6], 1
    %140 = vsyncpa [#allocation9], 1
    %141 = vsyncpa [#allocation4], 1

</llo_original>
